<compile_context>
chip_gen: v6e
topology: v6e:2x2x1
jax: 0.10.0
libtpu: 0.0.40
codegen_flags: <defaults>
</compile_context>

<pallas_src>
import functools

import jax
import jax.numpy as jnp
from jax.experimental import pallas as pl
from jax.experimental.pallas import tpu as pltpu


def _round_up(x, m):
    return ((x + m - 1) // m) * m


def _cdiv(a, b):
    return -(-a // b)


# ----------------------------------------------------------------------------
# Kernel: 5 fused linears (ReLU after the first 4), weights resident in VMEM.
# ----------------------------------------------------------------------------
def ae2_kernel(x_ref, w_in_ref, w_mid_ref, w_out_ref, b_mid_ref, b_out_ref,
               out_ref):
    # Layer 0: (tile_b, P) @ (P, 128) + b0, ReLU.
    h = jnp.dot(x_ref[...], w_in_ref[...], preferred_element_type=jnp.float32)
    h = jnp.maximum(h + b_mid_ref[0], 0.0)

    # Layers 1..3 (64->16, folded 16->16, 16->64), all padded to 128x128, ReLU.
    for i in range(w_mid_ref.shape[0]):                 # static unroll (3)
        h = jnp.dot(h, w_mid_ref[i], preferred_element_type=jnp.float32)
        h = jnp.maximum(h + b_mid_ref[i + 1], 0.0)

    # Layer 4: (tile_b, 128) @ (128, P) + b_last, no activation.
    out = jnp.dot(h, w_out_ref[...], preferred_element_type=jnp.float32)
    out_ref[...] = (out + b_out_ref[...]).astype(out_ref.dtype)


# ----------------------------------------------------------------------------
# One-time parameter packing (PyTorch layout -> padded, ragged slabs).
# ----------------------------------------------------------------------------
def pack_params(params, n_pixels, dtype=jnp.float32):
    """params: list of 6 (W, b), PyTorch layout W: (out, in), b: (out,)."""
    P = _round_up(max(n_pixels, 1), 128)

    ws = [jnp.asarray(w, jnp.float32).T for (w, _) in params]   # (in, out)
    bs = [jnp.asarray(b, jnp.float32) for (_, b) in params]

    # Fold encoder Linear(16,8) and decoder Linear(8,16): no activation between.
    # (Exact in real arithmetic; done in f32, never in bf16.)
    w34 = ws[2] @ ws[3]                      # (16, 16)
    b34 = bs[2] @ ws[3] + bs[3]              # (16,)
    ws_f = [ws[0], ws[1], w34, ws[4], ws[5]]
    bs_f = [bs[0], bs[1], b34, bs[4], bs[5]]

    # First layer: (P, 128)
    w_in = jnp.zeros((P, 128), dtype)
    w_in = w_in.at[: ws_f[0].shape[0], : ws_f[0].shape[1]].set(
        ws_f[0].astype(dtype))

    # Middle layers: (3, 128, 128); biases for layers 0..3: (4, 1, 128)
    w_mid = jnp.zeros((3, 128, 128), dtype)
    b_mid = jnp.zeros((4, 1, 128), dtype)
    b_mid = b_mid.at[0, 0, : bs_f[0].shape[0]].set(bs_f[0].astype(dtype))
    for i in range(3):
        w = ws_f[i + 1]
        b = bs_f[i + 1]
        w_mid = w_mid.at[i, : w.shape[0], : w.shape[1]].set(w.astype(dtype))
        b_mid = b_mid.at[i + 1, 0, : b.shape[0]].set(b.astype(dtype))

    # Last layer: (128, P) and bias (1, P)
    w_out = jnp.zeros((128, P), dtype)
    w_out = w_out.at[: ws_f[4].shape[0], : ws_f[4].shape[1]].set(
        ws_f[4].astype(dtype))
    b_out = jnp.zeros((1, P), dtype)
    b_out = b_out.at[0, : bs_f[4].shape[0]].set(bs_f[4].astype(dtype))

    return w_in, w_mid, w_out, b_mid, b_out


# ----------------------------------------------------------------------------
# Batch-tile selection: big tiles (amortize ~0.35us/step), balanced so padded
# rows are bounded, and >= 2 grid steps when B is large (v7x 2-TC sharding).
# ----------------------------------------------------------------------------
def _choose_batch_tiling(B, P):
    MAX_TILE = 2048
    budget = 24 * 1024 * 1024                      # conservative scoped-VMEM budget
    # in + out tiles double-buffered (P-wide) + ~6 intermediate 128-wide temps.
    per_row_bytes = 4 * (4 * P + 6 * 128)
    cap = min(MAX_TILE, max(8, (budget // per_row_bytes) // 8 * 8))

    n_tiles = max(1, _cdiv(B, cap))
    if B >= 16:
        n_tiles = max(n_tiles, 2)                  # keep both v7x TCs busy
    tile_b = _round_up(_cdiv(B, n_tiles), 8)
    return tile_b, n_tiles * tile_b


# ----------------------------------------------------------------------------
# Forward wrapper.
# ----------------------------------------------------------------------------
@functools.partial(jax.jit, static_argnames=("n_pixels",))
def ae2_forward(x, w_in, w_mid, w_out, b_mid, b_out, *, n_pixels):
    B = x.shape[0]
    P = w_in.shape[0]

    tile_b, b_pad = _choose_batch_tiling(B, P)

    x_p = x.astype(w_in.dtype)
    needs_pad = (b_pad, P) != (B, n_pixels)
    if needs_pad:
        # TODO(synk): ragged batch could use in-kernel masked short-writes on
        # the last tile instead of this pad copy; only triggers when shapes
        # are misaligned (the aligned fast path below copies nothing).
        x_p = jnp.zeros((b_pad, P), x_p.dtype).at[:B, :n_pixels].set(x_p)

    flops = 2 * b_pad * (P * 128 + 3 * 128 * 128 + 128 * P)
    bytes_accessed = 4 * (2 * b_pad * P + w_in.size + w_mid.size + w_out.size
                          + b_mid.size + b_out.size)

    out = pl.pallas_call(
        ae2_kernel,
        out_shape=jax.ShapeDtypeStruct((b_pad, P), x.dtype),
        grid=(b_pad // tile_b,),
        in_specs=[
            pl.BlockSpec((tile_b, P), lambda i: (i, 0)),        # x tile
            pl.BlockSpec((P, 128), lambda i: (0, 0)),           # W0  (resident)
            pl.BlockSpec((3, 128, 128), lambda i: (0, 0, 0)),   # W1..W3 (resident)
            pl.BlockSpec((128, P), lambda i: (0, 0)),           # W4  (resident)
            pl.BlockSpec((4, 1, 128), lambda i: (0, 0, 0)),     # b0..b3
            pl.BlockSpec((1, P), lambda i: (0, 0)),             # b4
        ],
        out_specs=pl.BlockSpec((tile_b, P), lambda i: (i, 0)),
        compiler_params=pltpu.CompilerParams(
            dimension_semantics=("parallel",),
        ),
        cost_estimate=pl.CostEstimate(
            flops=flops, transcendentals=0, bytes_accessed=bytes_accessed),
    )(x_p, w_in, w_mid, w_out, b_mid, b_out)

    if needs_pad:
        out = out[:B, :n_pixels]
    return out


# ----------------------------------------------------------------------------
# Reference (unfused, original 6-layer PyTorch semantics) + init.
# ----------------------------------------------------------------------------
def init_params(key, n_pixels):
    """torch.nn.Linear default init (uniform +/- 1/sqrt(fan_in))."""
    dims = [(n_pixels, 64), (64, 16), (16, 8),       # encoder
            (8, 16), (16, 64), (64, n_pixels)]       # decoder
    params = []
    for (fan_in, fan_out) in dims:
        key, kw, kb = jax.random.split(key, 3)
        bound = 1.0 / jnp.sqrt(float(fan_in))
        w = jax.random.uniform(kw, (fan_out, fan_in), jnp.float32, -bound, bound)
        b = jax.random.uniform(kb, (fan_out,), jnp.float32, -bound, bound)
        params.append((w, b))
    return params


def reference_forward(x, params):
    h = x
    for i, (w, b) in enumerate(params[:3]):          # encoder
        h = h @ w.T + b
        if i < 2:
            h = jnp.maximum(h, 0.0)
    for i, (w, b) in enumerate(params[3:]):          # decoder
        h = h @ w.T + b
        if i < 2:
            h = jnp.maximum(h, 0.0)
    return h


if __name__ == "__main__":
    key = jax.random.PRNGKey(0)
    n_pixels = 128
    batch = 16            # -> 2 batch tiles of 8 rows, exercises the parallel grid

    k_x, k_p = jax.random.split(key)
    x = jax.random.normal(k_x, (batch, n_pixels), jnp.float32)
    params = init_params(k_p, n_pixels)

    packed = pack_params(params, n_pixels)           # one-time packing

    out = ae2_forward(x, *packed, n_pixels=n_pixels)
    out = jax.block_until_ready(out)

    ref = reference_forward(x, params)
    assert out.shape == (batch, n_pixels), out.shape
    assert jnp.allclose(out, ref, atol=1e-4, rtol=1e-4), "mismatch vs reference"

    print("KERNEL_OK")
</pallas_src>

<mosaic_0001>
module attributes {stable_mosaic.version = 11 : i64} {
  func.func @ae2_kernel(%arg0: i32, %arg1: memref<8x128xf32, #tpu.memory_space<vmem>>, %arg2: memref<128x128xf32, #tpu.memory_space<vmem>>, %arg3: memref<3x128x128xf32, #tpu.memory_space<vmem>>, %arg4: memref<128x128xf32, #tpu.memory_space<vmem>>, %arg5: memref<4x1x128xf32, #tpu.memory_space<vmem>>, %arg6: memref<1x128xf32, #tpu.memory_space<vmem>>, %arg7: memref<8x128xf32, #tpu.memory_space<vmem>>) attributes {dimension_semantics = [#tpu.dimension_semantics<parallel>], iteration_bounds = array<i64: 2>, scalar_prefetch = 0 : i64, scratch_operands = 0 : i64, tpu.core_type = #tpu.core_type<tc>, window_params = [{transform_indices = @transform_0, window_bounds = array<i64: 8, 128>}, {pipeline_mode = #tpu.pipeline_mode<synchronous>, transform_indices = @transform_1, window_bounds = array<i64: 128, 128>}, {pipeline_mode = #tpu.pipeline_mode<synchronous>, transform_indices = @transform_2, window_bounds = array<i64: 3, 128, 128>}, {pipeline_mode = #tpu.pipeline_mode<synchronous>, transform_indices = @transform_3, window_bounds = array<i64: 128, 128>}, {pipeline_mode = #tpu.pipeline_mode<synchronous>, transform_indices = @transform_4, window_bounds = array<i64: 4, 1, 128>}, {pipeline_mode = #tpu.pipeline_mode<synchronous>, transform_indices = @transform_5, window_bounds = array<i64: 1, 128>}, {transform_indices = @transform_6, window_bounds = array<i64: 8, 128>}]} {
    %c0 = arith.constant 0 : index
    %c0_0 = arith.constant 0 : index
    %0 = vector.load %arg1[%c0, %c0_0] : memref<8x128xf32, #tpu.memory_space<vmem>>, vector<8x128xf32>
    %c0_1 = arith.constant 0 : index
    %c0_2 = arith.constant 0 : index
    %1 = vector.load %arg2[%c0_1, %c0_2] : memref<128x128xf32, #tpu.memory_space<vmem>>, vector<128x128xf32>
    %cst = arith.constant dense<0.000000e+00> : vector<8x128xf32>
    %2 = tpu.matmul %0, %1, %cst {dimension_numbers = #tpu.dot_dimension_numbers<[1], [0], [0], [1], [0, 0, 1, 1], [], []>} : vector<8x128xf32>, vector<128x128xf32>, vector<8x128xf32> -> vector<8x128xf32>
    %c0_3 = arith.constant 0 : index
    %c0_4 = arith.constant 0 : index
    %c0_5 = arith.constant 0 : index
    %3 = vector.load %arg5[%c0_3, %c0_4, %c0_5] : memref<4x1x128xf32, #tpu.memory_space<vmem>>, vector<1x1x128xf32>
    %4 = vector.shape_cast %3 : vector<1x1x128xf32> to vector<1x128xf32>
    %5 = vector.broadcast %4 : vector<1x128xf32> to vector<8x128xf32>
    %6 = arith.addf %2, %5 : vector<8x128xf32>
    %cst_6 = arith.constant 0.000000e+00 : f32
    %7 = vector.broadcast %cst_6 : f32 to vector<8x128xf32>
    %8 = arith.maximumf %6, %7 : vector<8x128xf32>
    %c0_7 = arith.constant 0 : index
    %c0_8 = arith.constant 0 : index
    %c0_9 = arith.constant 0 : index
    %9 = vector.load %arg3[%c0_7, %c0_8, %c0_9] : memref<3x128x128xf32, #tpu.memory_space<vmem>>, vector<1x128x128xf32>
    %10 = vector.shape_cast %9 : vector<1x128x128xf32> to vector<128x128xf32>
    %cst_10 = arith.constant dense<0.000000e+00> : vector<8x128xf32>
    %11 = tpu.matmul %8, %10, %cst_10 {dimension_numbers = #tpu.dot_dimension_numbers<[1], [0], [0], [1], [0, 0, 1, 1], [], []>} : vector<8x128xf32>, vector<128x128xf32>, vector<8x128xf32> -> vector<8x128xf32>
    %c1 = arith.constant 1 : index
    %c0_11 = arith.constant 0 : index
    %c0_12 = arith.constant 0 : index
    %12 = vector.load %arg5[%c1, %c0_11, %c0_12] : memref<4x1x128xf32, #tpu.memory_space<vmem>>, vector<1x1x128xf32>
    %13 = vector.shape_cast %12 : vector<1x1x128xf32> to vector<1x128xf32>
    %14 = vector.broadcast %13 : vector<1x128xf32> to vector<8x128xf32>
    %15 = arith.addf %11, %14 : vector<8x128xf32>
    %cst_13 = arith.constant 0.000000e+00 : f32
    %16 = vector.broadcast %cst_13 : f32 to vector<8x128xf32>
    %17 = arith.maximumf %15, %16 : vector<8x128xf32>
    %c1_14 = arith.constant 1 : index
    %c0_15 = arith.constant 0 : index
    %c0_16 = arith.constant 0 : index
    %18 = vector.load %arg3[%c1_14, %c0_15, %c0_16] : memref<3x128x128xf32, #tpu.memory_space<vmem>>, vector<1x128x128xf32>
    %19 = vector.shape_cast %18 : vector<1x128x128xf32> to vector<128x128xf32>
    %cst_17 = arith.constant dense<0.000000e+00> : vector<8x128xf32>
    %20 = tpu.matmul %17, %19, %cst_17 {dimension_numbers = #tpu.dot_dimension_numbers<[1], [0], [0], [1], [0, 0, 1, 1], [], []>} : vector<8x128xf32>, vector<128x128xf32>, vector<8x128xf32> -> vector<8x128xf32>
    %c2 = arith.constant 2 : index
    %c0_18 = arith.constant 0 : index
    %c0_19 = arith.constant 0 : index
    %21 = vector.load %arg5[%c2, %c0_18, %c0_19] : memref<4x1x128xf32, #tpu.memory_space<vmem>>, vector<1x1x128xf32>
    %22 = vector.shape_cast %21 : vector<1x1x128xf32> to vector<1x128xf32>
    %23 = vector.broadcast %22 : vector<1x128xf32> to vector<8x128xf32>
    %24 = arith.addf %20, %23 : vector<8x128xf32>
    %cst_20 = arith.constant 0.000000e+00 : f32
    %25 = vector.broadcast %cst_20 : f32 to vector<8x128xf32>
    %26 = arith.maximumf %24, %25 : vector<8x128xf32>
    %c2_21 = arith.constant 2 : index
    %c0_22 = arith.constant 0 : index
    %c0_23 = arith.constant 0 : index
    %27 = vector.load %arg3[%c2_21, %c0_22, %c0_23] : memref<3x128x128xf32, #tpu.memory_space<vmem>>, vector<1x128x128xf32>
    %28 = vector.shape_cast %27 : vector<1x128x128xf32> to vector<128x128xf32>
    %cst_24 = arith.constant dense<0.000000e+00> : vector<8x128xf32>
    %29 = tpu.matmul %26, %28, %cst_24 {dimension_numbers = #tpu.dot_dimension_numbers<[1], [0], [0], [1], [0, 0, 1, 1], [], []>} : vector<8x128xf32>, vector<128x128xf32>, vector<8x128xf32> -> vector<8x128xf32>
    %c3 = arith.constant 3 : index
    %c0_25 = arith.constant 0 : index
    %c0_26 = arith.constant 0 : index
    %30 = vector.load %arg5[%c3, %c0_25, %c0_26] : memref<4x1x128xf32, #tpu.memory_space<vmem>>, vector<1x1x128xf32>
    %31 = vector.shape_cast %30 : vector<1x1x128xf32> to vector<1x128xf32>
    %32 = vector.broadcast %31 : vector<1x128xf32> to vector<8x128xf32>
    %33 = arith.addf %29, %32 : vector<8x128xf32>
    %cst_27 = arith.constant 0.000000e+00 : f32
    %34 = vector.broadcast %cst_27 : f32 to vector<8x128xf32>
    %35 = arith.maximumf %33, %34 : vector<8x128xf32>
    %c0_28 = arith.constant 0 : index
    %c0_29 = arith.constant 0 : index
    %36 = vector.load %arg4[%c0_28, %c0_29] : memref<128x128xf32, #tpu.memory_space<vmem>>, vector<128x128xf32>
    %cst_30 = arith.constant dense<0.000000e+00> : vector<8x128xf32>
    %37 = tpu.matmul %35, %36, %cst_30 {dimension_numbers = #tpu.dot_dimension_numbers<[1], [0], [0], [1], [0, 0, 1, 1], [], []>} : vector<8x128xf32>, vector<128x128xf32>, vector<8x128xf32> -> vector<8x128xf32>
    %c0_31 = arith.constant 0 : index
    %c0_32 = arith.constant 0 : index
    %38 = vector.load %arg6[%c0_31, %c0_32] : memref<1x128xf32, #tpu.memory_space<vmem>>, vector<1x128xf32>
    %39 = vector.broadcast %38 : vector<1x128xf32> to vector<8x128xf32>
    %40 = arith.addf %37, %39 : vector<8x128xf32>
    %c0_33 = arith.constant 0 : index
    %c0_34 = arith.constant 0 : index
    %41 = vector.load %arg7[%c0_33, %c0_34] : memref<8x128xf32, #tpu.memory_space<vmem>>, vector<8x128xf32>
    tpu.vector_store %arg7[%c0_33, %c0_34], %40 {strides = array<i32>} : memref<8x128xf32, #tpu.memory_space<vmem>>, vector<8x128xf32>,
    return
  }
  func.func @transform_0(%arg0: i32) -> (i32, i32) {
    %c0_i32 = arith.constant 0 : i32
    %c0_i32_0 = arith.constant 0 : i32
    return %arg0, %c0_i32 : i32, i32
  }
  func.func @transform_1(%arg0: i32) -> (i32, i32) {
    %c0_i32 = arith.constant 0 : i32
    %c0_i32_0 = arith.constant 0 : i32
    %c0_i32_1 = arith.constant 0 : i32
    return %c0_i32, %c0_i32_0 : i32, i32
  }
  func.func @transform_2(%arg0: i32) -> (i32, i32, i32) {
    %c0_i32 = arith.constant 0 : i32
    %c0_i32_0 = arith.constant 0 : i32
    %c0_i32_1 = arith.constant 0 : i32
    %c0_i32_2 = arith.constant 0 : i32
    return %c0_i32, %c0_i32_0, %c0_i32_1 : i32, i32, i32
  }
  func.func @transform_3(%arg0: i32) -> (i32, i32) {
    %c0_i32 = arith.constant 0 : i32
    %c0_i32_0 = arith.constant 0 : i32
    %c0_i32_1 = arith.constant 0 : i32
    return %c0_i32, %c0_i32_0 : i32, i32
  }
  func.func @transform_4(%arg0: i32) -> (i32, i32, i32) {
    %c0_i32 = arith.constant 0 : i32
    %c0_i32_0 = arith.constant 0 : i32
    %c0_i32_1 = arith.constant 0 : i32
    %c0_i32_2 = arith.constant 0 : i32
    return %c0_i32, %c0_i32_0, %c0_i32_1 : i32, i32, i32
  }
  func.func @transform_5(%arg0: i32) -> (i32, i32) {
    %c0_i32 = arith.constant 0 : i32
    %c0_i32_0 = arith.constant 0 : i32
    %c0_i32_1 = arith.constant 0 : i32
    return %c0_i32, %c0_i32_0 : i32, i32
  }
  func.func @transform_6(%arg0: i32) -> (i32, i32) {
    %c0_i32 = arith.constant 0 : i32
    %c0_i32_0 = arith.constant 0 : i32
    return %arg0, %c0_i32 : i32, i32
  }
}

</mosaic_0001>

<llo_original>
// kernel: ae2_forward.1
$region0: #{ae2_forward.1}
  #allocation0 [shape = 'u32[]', space=smem, size = 0x4, offset = 0x4, fixed_abs, tag = 'smem constant byte address 0x4 - core index']
  #allocation1 [shape = 'u32[144,128]{1,0:T(1,128)}', space=vmem, size = 0x12000, scoped, tag = 'internal scratch']
  %s0 = inlined_call_operand.hbm [shape: f32[16,128], index: 0, kind: input, shape index: {}]
  %s1 = inlined_call_operand.hbm [shape: f32[128,128], index: 1, kind: input, shape index: {}]
  %s2 = inlined_call_operand.hbm [shape: f32[3,128,128], index: 2, kind: input, shape index: {}]
  %s3 = inlined_call_operand.hbm [shape: f32[128,128], index: 3, kind: input, shape index: {}]
  %s4 = inlined_call_operand.vmem [shape: f32[4,1,128], index: 4, kind: input, shape index: {}]
  %s5 = inlined_call_operand.vmem [shape: f32[1,128], index: 5, kind: input, shape index: {}]
  %s6 = inlined_call_operand.hbm [shape: f32[16,128], index: 6, kind: output, shape index: {}]
  %s7 = sld [smem:[#allocation0]]
  $region73: #{ae2_forward.1} parent=0
    _
  %s9 = ssub.s32 1, %s7
  %s10 = scalar_select 0, %s9, %s7
  $region1: #{ae2_forward.1} parent=0
    #allocation2 [shape = 'u8[8192]{0}', space=vmem, size = 0x2000, scoped, tag = 'input window, operand 0']
    #allocation3 [shape = 's32[2]{0}', space=sflag, size = 0x8, scoped, tag = 'scoped memory for ae2_forward.1']
    #allocation4 [shape = 's32[2]{0}', space=sflag, size = 0x8, scoped, tag = 'scoped memory for ae2_forward.1']
    #allocation5 [shape = 'u8[65536]{0}', space=vmem, size = 0x10000, scoped, tag = 'input window, operand 1, single buffered']
    #allocation6 [shape = 's32[1]{0}', space=sflag, size = 0x4, scoped, tag = 'scoped memory for ae2_forward.1']
    #allocation7 [shape = 'u8[196608]{0}', space=vmem, size = 0x30000, scoped, tag = 'input window, operand 2, single buffered']
    #allocation8 [shape = 'u8[65536]{0}', space=vmem, size = 0x10000, scoped, tag = 'input window, operand 3, single buffered']
    #allocation9 [shape = 's32[1]{0}', space=sflag, size = 0x4, scoped, tag = 'scoped memory for ae2_forward.1']
    #allocation10 [shape = 'u8[8192]{0}', space=vmem, size = 0x2000, scoped, tag = 'output window, operand 0']
    %11 = vsyncpa [#allocation3], 0
    %s12 = scalar_lea.sflag [#allocation3], 1
    %13 = vsyncpa %s12, 0
    %14 = vsyncpa [#allocation6], 0
    %15 = vsyncpa [#allocation9], 0
    %16 = vsyncpa [#allocation4], 0
    %s17 = scalar_lea.sflag [#allocation4], 1
    %18 = vsyncpa %s17, 0
    loop: start=0, step=1, limit=4
    $region2: #{ae2_forward.1} parent=1 // loop_pre_header
      _
    $region3: #{ae2_forward.1} parent=1 // loop_header
      %s20 = sphi 0, %s24
      %p21 = scmp.ge.s32.totalorder %s20, 4
      %s30 = sphi 0, %s32
      %s33 = sphi 0, %s30
      %s34 = sphi 0, %s33
      %s50 = sphi 0, %s34
      %s54 = sphi 0, %s54
      %s56 = sphi 0, %s54
      %s57 = sphi 0, %s56
      %s71 = sphi 0, %s57
      %s75 = sphi 0, %s75
      %s77 = sphi 0, %s75
      %s78 = sphi 0, %s77
      %s92 = sphi 0, %s78
      %s96 = sphi 0, %s96
      %s98 = sphi 0, %s96
      %s99 = sphi 0, %s98
      %s113 = sphi 0, %s99
      %s117 = sphi 0, %s117
      %s119 = sphi 0, %s117
      %s120 = sphi 0, %s119
      %s134 = sphi 0, %s120
      %s138 = sphi 0, %s138
      %s140 = sphi 0, %s138
      %s141 = sphi 0, %s140
      %s155 = sphi 0, %s141
      %s161 = sphi 0, %s163
      %s164 = sphi 0, %s161
      %s165 = sphi 0, %s164
      %s181 = sphi 0, %s165
    $region4: #{ae2_forward.1} parent=1 // loop_header_branch
      %23 = sbr.rel (%p21) target = $region8
    $region5: #{ae2_forward.1} parent=1 // loop_body
      %s25 = ssub.s32 %s20, 1
      %s26 = ssub.s32 %s20, 2
      %s27 = sadd.s32 %s20, 1
      %s28 = ssub.s32 %s20, %s27
      %p29 = scmp.eq.s32.totalorder %s28, 0
      %s31 = sadd.s32 %s30, 1
      %s32 = scalar_select %p29, %s30, %s31
      %p35 = pneg %p29
      %p36 = scmp.eq.s32.totalorder %s20, 1
      %p37 = por %p35, %p36
      %p38 = scmp.ne.s32.totalorder %s30, %s33
      %p39 = scmp.eq.s32.totalorder %s20, 0
      %p40 = por %p38, %p39
      %p41 = scmp.ne.s32.totalorder %s30, %s33
      %p42 = scmp.eq.s32.totalorder %s25, 1
      %p43 = por %p41, %p42
      %p44 = scmp.ne.s32.totalorder %s33, %s34
      %p45 = scmp.eq.s32.totalorder %s25, 0
      %p46 = por %p44, %p45
      %p47 = scmp.ne.s32.totalorder %s33, %s34
      %p48 = scmp.eq.s32.totalorder %s26, 1
      %p49 = por %p47, %p48
      %p51 = scmp.ne.s32.totalorder %s34, %s50
      %p52 = scmp.eq.s32.totalorder %s26, 0
      %p53 = por %p51, %p52
      %s55 = sadd.s32 %s54, 1
      %p58 = scmp.eq.s32.totalorder %s20, 1
      %p59 = scmp.ne.s32.totalorder %s54, %s56
      %p60 = scmp.eq.s32.totalorder %s20, 0
      %p61 = por %p59, %p60
      %p62 = scmp.ne.s32.totalorder %s54, %s56
      %p63 = scmp.eq.s32.totalorder %s25, 1
      %p64 = por %p62, %p63
      %p65 = scmp.ne.s32.totalorder %s56, %s57
      %p66 = scmp.eq.s32.totalorder %s25, 0
      %p67 = por %p65, %p66
      %p68 = scmp.ne.s32.totalorder %s56, %s57
      %p69 = scmp.eq.s32.totalorder %s26, 1
      %p70 = por %p68, %p69
      %p72 = scmp.ne.s32.totalorder %s57, %s71
      %p73 = scmp.eq.s32.totalorder %s26, 0
      %p74 = por %p72, %p73
      %s76 = sadd.s32 %s75, 1
      %p79 = scmp.eq.s32.totalorder %s20, 1
      %p80 = scmp.ne.s32.totalorder %s75, %s77
      %p81 = scmp.eq.s32.totalorder %s20, 0
      %p82 = por %p80, %p81
      %p83 = scmp.ne.s32.totalorder %s75, %s77
      %p84 = scmp.eq.s32.totalorder %s25, 1
      %p85 = por %p83, %p84
      %p86 = scmp.ne.s32.totalorder %s77, %s78
      %p87 = scmp.eq.s32.totalorder %s25, 0
      %p88 = por %p86, %p87
      %p89 = scmp.ne.s32.totalorder %s77, %s78
      %p90 = scmp.eq.s32.totalorder %s26, 1
      %p91 = por %p89, %p90
      %p93 = scmp.ne.s32.totalorder %s78, %s92
      %p94 = scmp.eq.s32.totalorder %s26, 0
      %p95 = por %p93, %p94
      %s97 = sadd.s32 %s96, 1
      %p100 = scmp.eq.s32.totalorder %s20, 1
      %p101 = scmp.ne.s32.totalorder %s96, %s98
      %p102 = scmp.eq.s32.totalorder %s20, 0
      %p103 = por %p101, %p102
      %p104 = scmp.ne.s32.totalorder %s96, %s98
      %p105 = scmp.eq.s32.totalorder %s25, 1
      %p106 = por %p104, %p105
      %p107 = scmp.ne.s32.totalorder %s98, %s99
      %p108 = scmp.eq.s32.totalorder %s25, 0
      %p109 = por %p107, %p108
      %p110 = scmp.ne.s32.totalorder %s98, %s99
      %p111 = scmp.eq.s32.totalorder %s26, 1
      %p112 = por %p110, %p111
      %p114 = scmp.ne.s32.totalorder %s99, %s113
      %p115 = scmp.eq.s32.totalorder %s26, 0
      %p116 = por %p114, %p115
      %s118 = sadd.s32 %s117, 1
      %p121 = scmp.eq.s32.totalorder %s20, 1
      %p122 = scmp.ne.s32.totalorder %s117, %s119
      %p123 = scmp.eq.s32.totalorder %s20, 0
      %p124 = por %p122, %p123
      %p125 = scmp.ne.s32.totalorder %s117, %s119
      %p126 = scmp.eq.s32.totalorder %s25, 1
      %p127 = por %p125, %p126
      %p128 = scmp.ne.s32.totalorder %s119, %s120
      %p129 = scmp.eq.s32.totalorder %s25, 0
      %p130 = por %p128, %p129
      %p131 = scmp.ne.s32.totalorder %s119, %s120
      %p132 = scmp.eq.s32.totalorder %s26, 1
      %p133 = por %p131, %p132
      %p135 = scmp.ne.s32.totalorder %s120, %s134
      %p136 = scmp.eq.s32.totalorder %s26, 0
      %p137 = por %p135, %p136
      %s139 = sadd.s32 %s138, 1
      %p142 = scmp.eq.s32.totalorder %s20, 1
      %p143 = scmp.ne.s32.totalorder %s138, %s140
      %p144 = scmp.eq.s32.totalorder %s20, 0
      %p145 = por %p143, %p144
      %p146 = scmp.ne.s32.totalorder %s138, %s140
      %p147 = scmp.eq.s32.totalorder %s25, 1
      %p148 = por %p146, %p147
      %p149 = scmp.ne.s32.totalorder %s140, %s141
      %p150 = scmp.eq.s32.totalorder %s25, 0
      %p151 = por %p149, %p150
      %p152 = scmp.ne.s32.totalorder %s140, %s141
      %p153 = scmp.eq.s32.totalorder %s26, 1
      %p154 = por %p152, %p153
      %p156 = scmp.ne.s32.totalorder %s141, %s155
      %p157 = scmp.eq.s32.totalorder %s26, 0
      %p158 = por %p156, %p157
      %s159 = ssub.s32 %s20, %s27
      %p160 = scmp.eq.s32.totalorder %s159, 0
      %s162 = sadd.s32 %s161, 1
      %s163 = scalar_select %p160, %s161, %s162
      %p166 = pneg %p160
      %p167 = scmp.eq.s32.totalorder %s20, 1
      %p168 = por %p166, %p167
      %p169 = scmp.ne.s32.totalorder %s161, %s164
      %p170 = scmp.eq.s32.totalorder %s20, 0
      %p171 = por %p169, %p170
      %p172 = scmp.ne.s32.totalorder %s161, %s164
      %p173 = scmp.eq.s32.totalorder %s25, 1
      %p174 = por %p172, %p173
      %p175 = scmp.ne.s32.totalorder %s164, %s165
      %p176 = scmp.eq.s32.totalorder %s25, 0
      %p177 = por %p175, %p176
      %p178 = scmp.ne.s32.totalorder %s164, %s165
      %p179 = scmp.eq.s32.totalorder %s26, 1
      %p180 = por %p178, %p179
      %p182 = scmp.ne.s32.totalorder %s165, %s181
      %p183 = scmp.eq.s32.totalorder %s26, 0
      %p184 = por %p182, %p183
      %p185 = scmp.le.s32.totalorder 1, %s20
      %p186 = scmp.lt.s32.totalorder %s20, 3
      %p187 = pnand %p185, %p186
      %p188 = pneg %p187
      // Predicated region
      $region9: #{ae2_forward.1} parent=5 // pred_check
        _
      $region10: #{ae2_forward.1} parent=5 // pred_check_branch
        %190 = sbr.rel (%p187) target = $region12
      $region11: #{ae2_forward.1} parent=5 // pred_region
        %s191 = ssub.s32 %s20, 1
        // Predicated region
        $region13: #{ae2_forward.1} parent=11 // pred_check
          %p192 = pneg %p67
        $region14: #{ae2_forward.1} parent=11 // pred_check_branch
          %194 = sbr.rel (%p192) target = $region16
        $region15: #{ae2_forward.1} parent=11 // pred_region
          %s196 = ssub.s32 2048, 2048
          %197 = vsyncadd [#allocation6], %s196
          %s198 = sshll.u32 [#allocation5], 4
          %s199 = int_to_ptr.vmem [resolvable:$true] %s198
          %204 = dma.hbm_to_vmem [thread:$0]  %s1, 2048, %s199, [#allocation6], 128, 128, 8
        $region16: #{ae2_forward.1} parent=11 // pred_fallthru
          _
        // Predicated region
        $region17: #{ae2_forward.1} parent=11 // pred_check
          %p205 = pneg %p88
        $region18: #{ae2_forward.1} parent=11 // pred_check_branch
          %207 = sbr.rel (%p205) target = $region20
        $region19: #{ae2_forward.1} parent=11 // pred_region
          %s209 = ssub.s32 6144, 6144
          %210 = vsyncadd [#allocation6], %s209
          %s211 = sshll.u32 [#allocation7], 4
          %s212 = int_to_ptr.vmem [resolvable:$true] %s211
          %217 = dma.hbm_to_vmem [thread:$0]  %s2, 6144, %s212, [#allocation6], 128, 128, 8
        $region20: #{ae2_forward.1} parent=11 // pred_fallthru
          _
        // Predicated region
        $region21: #{ae2_forward.1} parent=11 // pred_check
          %p218 = pneg %p109
        $region22: #{ae2_forward.1} parent=11 // pred_check_branch
          %220 = sbr.rel (%p218) target = $region24
        $region23: #{ae2_forward.1} parent=11 // pred_region
          %s222 = ssub.s32 2048, 2048
          %223 = vsyncadd [#allocation9], %s222
          %s224 = sshll.u32 [#allocation8], 4
          %s225 = int_to_ptr.vmem [resolvable:$true] %s224
          %230 = dma.hbm_to_vmem [thread:$0]  %s3, 2048, %s225, [#allocation9], 128, 128, 8
        $region24: #{ae2_forward.1} parent=11 // pred_fallthru
          _
        // Predicated region
        $region25: #{ae2_forward.1} parent=11 // pred_check
          %p231 = pneg %p130
        $region26: #{ae2_forward.1} parent=11 // pred_check_branch
          %233 = sbr.rel (%p231) target = $region28
        $region27: #{ae2_forward.1} parent=11 // pred_region
          _
        $region28: #{ae2_forward.1} parent=11 // pred_fallthru
          _
        // Predicated region
        $region29: #{ae2_forward.1} parent=11 // pred_check
          %p234 = pneg %p151
        $region30: #{ae2_forward.1} parent=11 // pred_check_branch
          %236 = sbr.rel (%p234) target = $region32
        $region31: #{ae2_forward.1} parent=11 // pred_region
          _
        $region32: #{ae2_forward.1} parent=11 // pred_fallthru
          _
      $region12: #{ae2_forward.1} parent=5 // pred_fallthru
        _
      %p237 = scmp.lt.s32.totalorder %s20, 2
      // Predicated region
      $region33: #{ae2_forward.1} parent=5 // pred_check
        %p238 = pneg %p237
      $region34: #{ae2_forward.1} parent=5 // pred_check_branch
        %240 = sbr.rel (%p238) target = $region36
      $region35: #{ae2_forward.1} parent=5 // pred_region
        // Predicated region
        $region37: #{ae2_forward.1} parent=35 // pred_check
          %p241 = pneg %p40
        $region38: #{ae2_forward.1} parent=35 // pred_check_branch
          %243 = sbr.rel (%p241) target = $region40
        $region39: #{ae2_forward.1} parent=35 // pred_region
          %s244 = sand.u32 %s30, 1
          %s245 = scalar_lea.sflag [#allocation3], %s244
          %s246 = sand.u32 %s30, 1
          %s247 = smul.addr %s246, 8
          %s248 = scalar_lea.vmem [#allocation2], %s247
          %s250 = ssub.s32 128, 128
          %251 = vsyncadd %s245, %s250
          %s252 = smul.addr %s20, 128
          %s253 = scalar_lea.hbm %s0, %s252
          %s255 = sshll.u32 %s248, 4
          %s256 = int_to_ptr.vmem [resolvable:$true] %s255
          %258 = dma.hbm_to_vmem [thread:$0]  %s253, 128, %s256, %s245
        $region40: #{ae2_forward.1} parent=35 // pred_fallthru
          _
      $region36: #{ae2_forward.1} parent=5 // pred_fallthru
        _
      %p259 = scmp.le.s32.totalorder 1, %s20
      %p260 = scmp.lt.s32.totalorder %s20, 3
      %p261 = pnand %p259, %p260
      %p262 = pneg %p261
      // Predicated region
      $region41: #{ae2_forward.1} parent=5 // pred_check
        _
      $region42: #{ae2_forward.1} parent=5 // pred_check_branch
        %264 = sbr.rel (%p261) target = $region44
      $region43: #{ae2_forward.1} parent=5 // pred_region
        %s265 = ssub.s32 %s20, 1
        %s266 = sand.u32 %s33, 1
        %s267 = scalar_lea.sflag [#allocation3], %s266
        %s268 = sand.u32 %s33, 1
        %s269 = smul.addr %s268, 8
        %s270 = scalar_lea.vmem [#allocation2], %s269
        // Predicated region
        $region45: #{ae2_forward.1} parent=43 // pred_check
          %p271 = pneg %p46
        $region46: #{ae2_forward.1} parent=43 // pred_check_branch
          %273 = sbr.rel (%p271) target = $region48
        $region47: #{ae2_forward.1} parent=43 // pred_region
          %274 = dma.done %s267, 128
        $region48: #{ae2_forward.1} parent=43 // pred_fallthru
          _
        // Predicated region
        $region49: #{ae2_forward.1} parent=43 // pred_check
          %p275 = pneg %p67
        $region50: #{ae2_forward.1} parent=43 // pred_check_branch
          %277 = sbr.rel (%p275) target = $region52
        $region51: #{ae2_forward.1} parent=43 // pred_region
          %278 = dma.done [#allocation6], 2048
        $region52: #{ae2_forward.1} parent=43 // pred_fallthru
          _
        // Predicated region
        $region53: #{ae2_forward.1} parent=43 // pred_check
          %p279 = pneg %p88
        $region54: #{ae2_forward.1} parent=43 // pred_check_branch
          %281 = sbr.rel (%p279) target = $region56
        $region55: #{ae2_forward.1} parent=43 // pred_region
          %282 = dma.done [#allocation6], 6144
        $region56: #{ae2_forward.1} parent=43 // pred_fallthru
          _
        // Predicated region
        $region57: #{ae2_forward.1} parent=43 // pred_check
          %p283 = pneg %p109
        $region58: #{ae2_forward.1} parent=43 // pred_check_branch
          %285 = sbr.rel (%p283) target = $region60
        $region59: #{ae2_forward.1} parent=43 // pred_region
          %286 = dma.done [#allocation9], 2048
        $region60: #{ae2_forward.1} parent=43 // pred_fallthru
          _
        %s287 = sand.u32 %s33, 1
        %s288 = scalar_lea.sflag [#allocation3], %s287
        %s289 = sand.u32 %s33, 1
        %s290 = smul.addr %s289, 8
        %s291 = scalar_lea.vmem [#allocation2], %s290
        %p292 = pneg %p46
        %p293 = pneg %p43
        %p294 = pneg %p67
        %p295 = pneg %p64
        %p296 = pneg %p88
        %p297 = pneg %p85
        %p298 = pneg %p109
        %p299 = pneg %p106
        %p300 = pneg %p130
        %p301 = pneg %p127
        %p302 = pneg %p151
        %p303 = pneg %p148
        %p304 = pneg %p177
        %p305 = pneg %p174
        %s306 = sand.u32 %s164, 1
        %s307 = scalar_lea.sflag [#allocation4], %s306
        %s308 = sand.u32 %s164, 1
        %s309 = smul.addr %s308, 8
        %s310 = scalar_lea.vmem [#allocation10], %s309
        %v311 = vld [vmem:[%s270] sm:$0xff]
        %v312 = vld [vmem:[#allocation5] sm:$0xff]
        %v313 = vld [vmem:[#allocation5 + $0x8] sm:$0xff]
        %v314 = vld [vmem:[#allocation5 + $0x10] sm:$0xff]
        %v315 = vld [vmem:[#allocation5 + $0x18] sm:$0xff]
        %v316 = vld [vmem:[#allocation5 + $0x20] sm:$0xff]
        %v317 = vld [vmem:[#allocation5 + $0x28] sm:$0xff]
        %v318 = vld [vmem:[#allocation5 + $0x30] sm:$0xff]
        %v319 = vld [vmem:[#allocation5 + $0x38] sm:$0xff]
        %v320 = vld [vmem:[#allocation5 + $0x40] sm:$0xff]
        %v321 = vld [vmem:[#allocation5 + $0x48] sm:$0xff]
        %v322 = vld [vmem:[#allocation5 + $0x50] sm:$0xff]
        %v323 = vld [vmem:[#allocation5 + $0x58] sm:$0xff]
        %v324 = vld [vmem:[#allocation5 + $0x60] sm:$0xff]
        %v325 = vld [vmem:[#allocation5 + $0x68] sm:$0xff]
        %v326 = vld [vmem:[#allocation5 + $0x70] sm:$0xff]
        %v327 = vld [vmem:[#allocation5 + $0x78] sm:$0xff]
        %v328 = vld [vmem:[%s4] sm:$0x1]
        %v330 = vlaneseq
        %v331 = vshrl.u32 %v330, 7
        %v332 = vsub.s32 0, %v331
        %v333 = vrot.slane %v328, %v332
        %335 = vmatprep.subr.mxu0 0.0
        %336 = vmatpush1.msra.mxu0 %v327
        %337 = vmatprep.subr.mxu0 0.0
        %338 = vmatpush1.msra.mxu0 %v326
        %339 = vmatprep.subr.mxu0 0.0
        %340 = vmatpush1.msra.mxu0 %v325
        %341 = vmatprep.subr.mxu0 0.0
        %342 = vmatpush1.msra.mxu0 %v324
        %343 = vmatprep.subr.mxu0 0.0
        %344 = vmatpush1.msra.mxu0 %v323
        %345 = vmatprep.subr.mxu0 0.0
        %346 = vmatpush1.msra.mxu0 %v322
        %347 = vmatprep.subr.mxu0 0.0
        %348 = vmatpush1.msra.mxu0 %v321
        %349 = vmatprep.subr.mxu0 0.0
        %350 = vmatpush1.msra.mxu0 %v320
        %351 = vmatprep.subr.mxu0 0.0
        %352 = vmatpush1.msra.mxu0 %v319
        %353 = vmatprep.subr.mxu0 0.0
        %354 = vmatpush1.msra.mxu0 %v318
        %355 = vmatprep.subr.mxu0 0.0
        %356 = vmatpush1.msra.mxu0 %v317
        %357 = vmatprep.subr.mxu0 0.0
        %358 = vmatpush1.msra.mxu0 %v316
        %359 = vmatprep.subr.mxu0 0.0
        %360 = vmatpush1.msra.mxu0 %v315
        %361 = vmatprep.subr.mxu0 0.0
        %362 = vmatpush1.msra.mxu0 %v314
        %363 = vmatprep.subr.mxu0 0.0
        %364 = vmatpush1.msra.mxu0 %v313
        %365 = vmatprep.subr.mxu0 0.0
        %366 = vmatpush1.msra.mxu0 %v312
        %367 = vmatprep.subr.mxu0 0.0
        %368 = vmatpush2.msra.mxu0 0.0
        %369 = vmatprep.subr.mxu0 0.0
        %370 = vmatpush2.msra.mxu0 0.0
        %371 = vmatprep.subr.mxu0 0.0
        %372 = vmatpush2.msra.mxu0 0.0
        %373 = vmatprep.subr.mxu0 0.0
        %374 = vmatpush2.msra.mxu0 0.0
        %375 = vmatprep.subr.mxu0 0.0
        %376 = vmatpush2.msra.mxu0 0.0
        %377 = vmatprep.subr.mxu0 0.0
        %378 = vmatpush2.msra.mxu0 0.0
        %379 = vmatprep.subr.mxu0 0.0
        %380 = vmatpush2.msra.mxu0 0.0
        %381 = vmatprep.subr.mxu0 0.0
        %382 = vmatpush2.msra.mxu0 0.0
        %383 = vmatprep.subr.mxu0 0.0
        %384 = vmatpush2.msra.mxu0 0.0
        %385 = vmatprep.subr.mxu0 0.0
        %386 = vmatpush2.msra.mxu0 0.0
        %387 = vmatprep.subr.mxu0 0.0
        %388 = vmatpush2.msra.mxu0 0.0
        %389 = vmatprep.subr.mxu0 0.0
        %390 = vmatpush2.msra.mxu0 0.0
        %391 = vmatprep.subr.mxu0 0.0
        %392 = vmatpush2.msra.mxu0 0.0
        %393 = vmatprep.subr.mxu0 0.0
        %394 = vmatpush2.msra.mxu0 0.0
        %395 = vmatprep.subr.mxu0 0.0
        %396 = vmatpush2.msra.mxu0 0.0
        %397 = vmatprep.subr.mxu0 0.0
        %398 = vmatpush2.msra.mxu0 0.0
        %399 = vmatprep.mubr.f32.mxu0 0.0
        %400 = vmatmul.mubr.f32.gmra.mxu0 %v311
        %v401 = vpop.f32.mrf.mxu0
        %v402 = vadd.f32 %v333, %v401
        %v403 = vpop.f32.mrf.mxu0
        %404 = vdwg.mxu0
        %v405 = vmax.f32 %v402, 0.0
        %v406 = vld [vmem:[#allocation7] sm:$0xff]
        %v407 = vld [vmem:[#allocation7 + $0x8] sm:$0xff]
        %v408 = vld [vmem:[#allocation7 + $0x10] sm:$0xff]
        %v409 = vld [vmem:[#allocation7 + $0x18] sm:$0xff]
        %v410 = vld [vmem:[#allocation7 + $0x20] sm:$0xff]
        %v411 = vld [vmem:[#allocation7 + $0x28] sm:$0xff]
        %v412 = vld [vmem:[#allocation7 + $0x30] sm:$0xff]
        %v413 = vld [vmem:[#allocation7 + $0x38] sm:$0xff]
        %v414 = vld [vmem:[#allocation7 + $0x40] sm:$0xff]
        %v415 = vld [vmem:[#allocation7 + $0x48] sm:$0xff]
        %v416 = vld [vmem:[#allocation7 + $0x50] sm:$0xff]
        %v417 = vld [vmem:[#allocation7 + $0x58] sm:$0xff]
        %v418 = vld [vmem:[#allocation7 + $0x60] sm:$0xff]
        %v419 = vld [vmem:[#allocation7 + $0x68] sm:$0xff]
        %v420 = vld [vmem:[#allocation7 + $0x70] sm:$0xff]
        %v421 = vld [vmem:[#allocation7 + $0x78] sm:$0xff]
        %s422 = scalar_lea.vmem %s4, 1
        %v423 = vld [vmem:[%s422] sm:$0x1]
        %v425 = vlaneseq
        %v426 = vshrl.u32 %v425, 7
        %v427 = vsub.s32 0, %v426
        %v428 = vrot.slane %v423, %v427
        %430 = vmatprep.subr.mxu0 0.0
        %431 = vmatpush1.msra.mxu0 %v421
        %432 = vmatprep.subr.mxu0 0.0
        %433 = vmatpush1.msra.mxu0 %v420
        %434 = vmatprep.subr.mxu0 0.0
        %435 = vmatpush1.msra.mxu0 %v419
        %436 = vmatprep.subr.mxu0 0.0
        %437 = vmatpush1.msra.mxu0 %v418
        %438 = vmatprep.subr.mxu0 0.0
        %439 = vmatpush1.msra.mxu0 %v417
        %440 = vmatprep.subr.mxu0 0.0
        %441 = vmatpush1.msra.mxu0 %v416
        %442 = vmatprep.subr.mxu0 0.0
        %443 = vmatpush1.msra.mxu0 %v415
        %444 = vmatprep.subr.mxu0 0.0
        %445 = vmatpush1.msra.mxu0 %v414
        %446 = vmatprep.subr.mxu0 0.0
        %447 = vmatpush1.msra.mxu0 %v413
        %448 = vmatprep.subr.mxu0 0.0
        %449 = vmatpush1.msra.mxu0 %v412
        %450 = vmatprep.subr.mxu0 0.0
        %451 = vmatpush1.msra.mxu0 %v411
        %452 = vmatprep.subr.mxu0 0.0
        %453 = vmatpush1.msra.mxu0 %v410
        %454 = vmatprep.subr.mxu0 0.0
        %455 = vmatpush1.msra.mxu0 %v409
        %456 = vmatprep.subr.mxu0 0.0
        %457 = vmatpush1.msra.mxu0 %v408
        %458 = vmatprep.subr.mxu0 0.0
        %459 = vmatpush1.msra.mxu0 %v407
        %460 = vmatprep.subr.mxu0 0.0
        %461 = vmatpush1.msra.mxu0 %v406
        %462 = vmatprep.subr.mxu0 0.0
        %463 = vmatpush2.msra.mxu0 0.0
        %464 = vmatprep.subr.mxu0 0.0
        %465 = vmatpush2.msra.mxu0 0.0
        %466 = vmatprep.subr.mxu0 0.0
        %467 = vmatpush2.msra.mxu0 0.0
        %468 = vmatprep.subr.mxu0 0.0
        %469 = vmatpush2.msra.mxu0 0.0
        %470 = vmatprep.subr.mxu0 0.0
        %471 = vmatpush2.msra.mxu0 0.0
        %472 = vmatprep.subr.mxu0 0.0
        %473 = vmatpush2.msra.mxu0 0.0
        %474 = vmatprep.subr.mxu0 0.0
        %475 = vmatpush2.msra.mxu0 0.0
        %476 = vmatprep.subr.mxu0 0.0
        %477 = vmatpush2.msra.mxu0 0.0
        %478 = vmatprep.subr.mxu0 0.0
        %479 = vmatpush2.msra.mxu0 0.0
        %480 = vmatprep.subr.mxu0 0.0
        %481 = vmatpush2.msra.mxu0 0.0
        %482 = vmatprep.subr.mxu0 0.0
        %483 = vmatpush2.msra.mxu0 0.0
        %484 = vmatprep.subr.mxu0 0.0
        %485 = vmatpush2.msra.mxu0 0.0
        %486 = vmatprep.subr.mxu0 0.0
        %487 = vmatpush2.msra.mxu0 0.0
        %488 = vmatprep.subr.mxu0 0.0
        %489 = vmatpush2.msra.mxu0 0.0
        %490 = vmatprep.subr.mxu0 0.0
        %491 = vmatpush2.msra.mxu0 0.0
        %492 = vmatprep.subr.mxu0 0.0
        %493 = vmatpush2.msra.mxu0 0.0
        %494 = vmatprep.mubr.f32.mxu0 0.0
        %495 = vmatmul.mubr.f32.gmra.mxu0 %v405
        %v496 = vpop.f32.mrf.mxu0
        %v497 = vadd.f32 %v428, %v496
        %v498 = vpop.f32.mrf.mxu0
        %499 = vdwg.mxu0
        %v500 = vmax.f32 %v497, 0.0
        %s501 = scalar_lea.vmem [#allocation7], 128
        %v502 = vld [vmem:[%s501] sm:$0xff]
        %v503 = vld [vmem:[%s501 + $0x8] sm:$0xff]
        %v504 = vld [vmem:[%s501 + $0x10] sm:$0xff]
        %v505 = vld [vmem:[%s501 + $0x18] sm:$0xff]
        %v506 = vld [vmem:[%s501 + $0x20] sm:$0xff]
        %v507 = vld [vmem:[%s501 + $0x28] sm:$0xff]
        %v508 = vld [vmem:[%s501 + $0x30] sm:$0xff]
        %v509 = vld [vmem:[%s501 + $0x38] sm:$0xff]
        %v510 = vld [vmem:[%s501 + $0x40] sm:$0xff]
        %v511 = vld [vmem:[%s501 + $0x48] sm:$0xff]
        %v512 = vld [vmem:[%s501 + $0x50] sm:$0xff]
        %v513 = vld [vmem:[%s501 + $0x58] sm:$0xff]
        %v514 = vld [vmem:[%s501 + $0x60] sm:$0xff]
        %v515 = vld [vmem:[%s501 + $0x68] sm:$0xff]
        %v516 = vld [vmem:[%s501 + $0x70] sm:$0xff]
        %v517 = vld [vmem:[%s501 + $0x78] sm:$0xff]
        %s518 = scalar_lea.vmem %s4, 2
        %v519 = vld [vmem:[%s518] sm:$0x1]
        %v521 = vlaneseq
        %v522 = vshrl.u32 %v521, 7
        %v523 = vsub.s32 0, %v522
        %v524 = vrot.slane %v519, %v523
        %526 = vmatprep.subr.mxu0 0.0
        %527 = vmatpush1.msra.mxu0 %v517
        %528 = vmatprep.subr.mxu0 0.0
        %529 = vmatpush1.msra.mxu0 %v516
        %530 = vmatprep.subr.mxu0 0.0
        %531 = vmatpush1.msra.mxu0 %v515
        %532 = vmatprep.subr.mxu0 0.0
        %533 = vmatpush1.msra.mxu0 %v514
        %534 = vmatprep.subr.mxu0 0.0
        %535 = vmatpush1.msra.mxu0 %v513
        %536 = vmatprep.subr.mxu0 0.0
        %537 = vmatpush1.msra.mxu0 %v512
        %538 = vmatprep.subr.mxu0 0.0
        %539 = vmatpush1.msra.mxu0 %v511
        %540 = vmatprep.subr.mxu0 0.0
        %541 = vmatpush1.msra.mxu0 %v510
        %542 = vmatprep.subr.mxu0 0.0
        %543 = vmatpush1.msra.mxu0 %v509
        %544 = vmatprep.subr.mxu0 0.0
        %545 = vmatpush1.msra.mxu0 %v508
        %546 = vmatprep.subr.mxu0 0.0
        %547 = vmatpush1.msra.mxu0 %v507
        %548 = vmatprep.subr.mxu0 0.0
        %549 = vmatpush1.msra.mxu0 %v506
        %550 = vmatprep.subr.mxu0 0.0
        %551 = vmatpush1.msra.mxu0 %v505
        %552 = vmatprep.subr.mxu0 0.0
        %553 = vmatpush1.msra.mxu0 %v504
        %554 = vmatprep.subr.mxu0 0.0
        %555 = vmatpush1.msra.mxu0 %v503
        %556 = vmatprep.subr.mxu0 0.0
        %557 = vmatpush1.msra.mxu0 %v502
        %558 = vmatprep.subr.mxu0 0.0
        %559 = vmatpush2.msra.mxu0 0.0
        %560 = vmatprep.subr.mxu0 0.0
        %561 = vmatpush2.msra.mxu0 0.0
        %562 = vmatprep.subr.mxu0 0.0
        %563 = vmatpush2.msra.mxu0 0.0
        %564 = vmatprep.subr.mxu0 0.0
        %565 = vmatpush2.msra.mxu0 0.0
        %566 = vmatprep.subr.mxu0 0.0
        %567 = vmatpush2.msra.mxu0 0.0
        %568 = vmatprep.subr.mxu0 0.0
        %569 = vmatpush2.msra.mxu0 0.0
        %570 = vmatprep.subr.mxu0 0.0
        %571 = vmatpush2.msra.mxu0 0.0
        %572 = vmatprep.subr.mxu0 0.0
        %573 = vmatpush2.msra.mxu0 0.0
        %574 = vmatprep.subr.mxu0 0.0
        %575 = vmatpush2.msra.mxu0 0.0
        %576 = vmatprep.subr.mxu0 0.0
        %577 = vmatpush2.msra.mxu0 0.0
        %578 = vmatprep.subr.mxu0 0.0
        %579 = vmatpush2.msra.mxu0 0.0
        %580 = vmatprep.subr.mxu0 0.0
        %581 = vmatpush2.msra.mxu0 0.0
        %582 = vmatprep.subr.mxu0 0.0
        %583 = vmatpush2.msra.mxu0 0.0
        %584 = vmatprep.subr.mxu0 0.0
        %585 = vmatpush2.msra.mxu0 0.0
        %586 = vmatprep.subr.mxu0 0.0
        %587 = vmatpush2.msra.mxu0 0.0
        %588 = vmatprep.subr.mxu0 0.0
        %589 = vmatpush2.msra.mxu0 0.0
        %590 = vmatprep.mubr.f32.mxu0 0.0
        %591 = vmatmul.mubr.f32.gmra.mxu0 %v500
        %v592 = vpop.f32.mrf.mxu0
        %v593 = vadd.f32 %v524, %v592
        %v594 = vpop.f32.mrf.mxu0
        %595 = vdwg.mxu0
        %v596 = vmax.f32 %v593, 0.0
        %s597 = scalar_lea.vmem [#allocation7], 256
        %v598 = vld [vmem:[%s597] sm:$0xff]
        %v599 = vld [vmem:[%s597 + $0x8] sm:$0xff]
        %v600 = vld [vmem:[%s597 + $0x10] sm:$0xff]
        %v601 = vld [vmem:[%s597 + $0x18] sm:$0xff]
        %v602 = vld [vmem:[%s597 + $0x20] sm:$0xff]
        %v603 = vld [vmem:[%s597 + $0x28] sm:$0xff]
        %v604 = vld [vmem:[%s597 + $0x30] sm:$0xff]
        %v605 = vld [vmem:[%s597 + $0x38] sm:$0xff]
        %v606 = vld [vmem:[%s597 + $0x40] sm:$0xff]
        %v607 = vld [vmem:[%s597 + $0x48] sm:$0xff]
        %v608 = vld [vmem:[%s597 + $0x50] sm:$0xff]
        %v609 = vld [vmem:[%s597 + $0x58] sm:$0xff]
        %v610 = vld [vmem:[%s597 + $0x60] sm:$0xff]
        %v611 = vld [vmem:[%s597 + $0x68] sm:$0xff]
        %v612 = vld [vmem:[%s597 + $0x70] sm:$0xff]
        %v613 = vld [vmem:[%s597 + $0x78] sm:$0xff]
        %s614 = scalar_lea.vmem %s4, 3
        %v615 = vld [vmem:[%s614] sm:$0x1]
        %v617 = vlaneseq
        %v618 = vshrl.u32 %v617, 7
        %v619 = vsub.s32 0, %v618
        %v620 = vrot.slane %v615, %v619
        %622 = vmatprep.subr.mxu0 0.0
        %623 = vmatpush1.msra.mxu0 %v613
        %624 = vmatprep.subr.mxu0 0.0
        %625 = vmatpush1.msra.mxu0 %v612
        %626 = vmatprep.subr.mxu0 0.0
        %627 = vmatpush1.msra.mxu0 %v611
        %628 = vmatprep.subr.mxu0 0.0
        %629 = vmatpush1.msra.mxu0 %v610
        %630 = vmatprep.subr.mxu0 0.0
        %631 = vmatpush1.msra.mxu0 %v609
        %632 = vmatprep.subr.mxu0 0.0
        %633 = vmatpush1.msra.mxu0 %v608
        %634 = vmatprep.subr.mxu0 0.0
        %635 = vmatpush1.msra.mxu0 %v607
        %636 = vmatprep.subr.mxu0 0.0
        %637 = vmatpush1.msra.mxu0 %v606
        %638 = vmatprep.subr.mxu0 0.0
        %639 = vmatpush1.msra.mxu0 %v605
        %640 = vmatprep.subr.mxu0 0.0
        %641 = vmatpush1.msra.mxu0 %v604
        %642 = vmatprep.subr.mxu0 0.0
        %643 = vmatpush1.msra.mxu0 %v603
        %644 = vmatprep.subr.mxu0 0.0
        %645 = vmatpush1.msra.mxu0 %v602
        %646 = vmatprep.subr.mxu0 0.0
        %647 = vmatpush1.msra.mxu0 %v601
        %648 = vmatprep.subr.mxu0 0.0
        %649 = vmatpush1.msra.mxu0 %v600
        %650 = vmatprep.subr.mxu0 0.0
        %651 = vmatpush1.msra.mxu0 %v599
        %652 = vmatprep.subr.mxu0 0.0
        %653 = vmatpush1.msra.mxu0 %v598
        %654 = vmatprep.subr.mxu0 0.0
        %655 = vmatpush2.msra.mxu0 0.0
        %656 = vmatprep.subr.mxu0 0.0
        %657 = vmatpush2.msra.mxu0 0.0
        %658 = vmatprep.subr.mxu0 0.0
        %659 = vmatpush2.msra.mxu0 0.0
        %660 = vmatprep.subr.mxu0 0.0
        %661 = vmatpush2.msra.mxu0 0.0
        %662 = vmatprep.subr.mxu0 0.0
        %663 = vmatpush2.msra.mxu0 0.0
        %664 = vmatprep.subr.mxu0 0.0
        %665 = vmatpush2.msra.mxu0 0.0
        %666 = vmatprep.subr.mxu0 0.0
        %667 = vmatpush2.msra.mxu0 0.0
        %668 = vmatprep.subr.mxu0 0.0
        %669 = vmatpush2.msra.mxu0 0.0
        %670 = vmatprep.subr.mxu0 0.0
        %671 = vmatpush2.msra.mxu0 0.0
        %672 = vmatprep.subr.mxu0 0.0
        %673 = vmatpush2.msra.mxu0 0.0
        %674 = vmatprep.subr.mxu0 0.0
        %675 = vmatpush2.msra.mxu0 0.0
        %676 = vmatprep.subr.mxu0 0.0
        %677 = vmatpush2.msra.mxu0 0.0
        %678 = vmatprep.subr.mxu0 0.0
        %679 = vmatpush2.msra.mxu0 0.0
        %680 = vmatprep.subr.mxu0 0.0
        %681 = vmatpush2.msra.mxu0 0.0
        %682 = vmatprep.subr.mxu0 0.0
        %683 = vmatpush2.msra.mxu0 0.0
        %684 = vmatprep.subr.mxu0 0.0
        %685 = vmatpush2.msra.mxu0 0.0
        %686 = vmatprep.mubr.f32.mxu0 0.0
        %687 = vmatmul.mubr.f32.gmra.mxu0 %v596
        %v688 = vpop.f32.mrf.mxu0
        %v689 = vadd.f32 %v620, %v688
        %v690 = vpop.f32.mrf.mxu0
        %691 = vdwg.mxu0
        %v692 = vmax.f32 %v689, 0.0
        %v693 = vld [vmem:[#allocation8] sm:$0xff]
        %v694 = vld [vmem:[#allocation8 + $0x8] sm:$0xff]
        %v695 = vld [vmem:[#allocation8 + $0x10] sm:$0xff]
        %v696 = vld [vmem:[#allocation8 + $0x18] sm:$0xff]
        %v697 = vld [vmem:[#allocation8 + $0x20] sm:$0xff]
        %v698 = vld [vmem:[#allocation8 + $0x28] sm:$0xff]
        %v699 = vld [vmem:[#allocation8 + $0x30] sm:$0xff]
        %v700 = vld [vmem:[#allocation8 + $0x38] sm:$0xff]
        %v701 = vld [vmem:[#allocation8 + $0x40] sm:$0xff]
        %v702 = vld [vmem:[#allocation8 + $0x48] sm:$0xff]
        %v703 = vld [vmem:[#allocation8 + $0x50] sm:$0xff]
        %v704 = vld [vmem:[#allocation8 + $0x58] sm:$0xff]
        %v705 = vld [vmem:[#allocation8 + $0x60] sm:$0xff]
        %v706 = vld [vmem:[#allocation8 + $0x68] sm:$0xff]
        %v707 = vld [vmem:[#allocation8 + $0x70] sm:$0xff]
        %v708 = vld [vmem:[#allocation8 + $0x78] sm:$0xff]
        %v709 = vld [vmem:[%s5] sm:$0x1]
        %v711 = vlaneseq
        %v712 = vshrl.u32 %v711, 7
        %v713 = vsub.s32 0, %v712
        %v714 = vrot.slane %v709, %v713
        %716 = vmatprep.subr.mxu0 0.0
        %717 = vmatpush1.msra.mxu0 %v708
        %718 = vmatprep.subr.mxu0 0.0
        %719 = vmatpush1.msra.mxu0 %v707
        %720 = vmatprep.subr.mxu0 0.0
        %721 = vmatpush1.msra.mxu0 %v706
        %722 = vmatprep.subr.mxu0 0.0
        %723 = vmatpush1.msra.mxu0 %v705
        %724 = vmatprep.subr.mxu0 0.0
        %725 = vmatpush1.msra.mxu0 %v704
        %726 = vmatprep.subr.mxu0 0.0
        %727 = vmatpush1.msra.mxu0 %v703
        %728 = vmatprep.subr.mxu0 0.0
        %729 = vmatpush1.msra.mxu0 %v702
        %730 = vmatprep.subr.mxu0 0.0
        %731 = vmatpush1.msra.mxu0 %v701
        %732 = vmatprep.subr.mxu0 0.0
        %733 = vmatpush1.msra.mxu0 %v700
        %734 = vmatprep.subr.mxu0 0.0
        %735 = vmatpush1.msra.mxu0 %v699
        %736 = vmatprep.subr.mxu0 0.0
        %737 = vmatpush1.msra.mxu0 %v698
        %738 = vmatprep.subr.mxu0 0.0
        %739 = vmatpush1.msra.mxu0 %v697
        %740 = vmatprep.subr.mxu0 0.0
        %741 = vmatpush1.msra.mxu0 %v696
        %742 = vmatprep.subr.mxu0 0.0
        %743 = vmatpush1.msra.mxu0 %v695
        %744 = vmatprep.subr.mxu0 0.0
        %745 = vmatpush1.msra.mxu0 %v694
        %746 = vmatprep.subr.mxu0 0.0
        %747 = vmatpush1.msra.mxu0 %v693
        %748 = vmatprep.subr.mxu0 0.0
        %749 = vmatpush2.msra.mxu0 0.0
        %750 = vmatprep.subr.mxu0 0.0
        %751 = vmatpush2.msra.mxu0 0.0
        %752 = vmatprep.subr.mxu0 0.0
        %753 = vmatpush2.msra.mxu0 0.0
        %754 = vmatprep.subr.mxu0 0.0
        %755 = vmatpush2.msra.mxu0 0.0
        %756 = vmatprep.subr.mxu0 0.0
        %757 = vmatpush2.msra.mxu0 0.0
        %758 = vmatprep.subr.mxu0 0.0
        %759 = vmatpush2.msra.mxu0 0.0
        %760 = vmatprep.subr.mxu0 0.0
        %761 = vmatpush2.msra.mxu0 0.0
        %762 = vmatprep.subr.mxu0 0.0
        %763 = vmatpush2.msra.mxu0 0.0
        %764 = vmatprep.subr.mxu0 0.0
        %765 = vmatpush2.msra.mxu0 0.0
        %766 = vmatprep.subr.mxu0 0.0
        %767 = vmatpush2.msra.mxu0 0.0
        %768 = vmatprep.subr.mxu0 0.0
        %769 = vmatpush2.msra.mxu0 0.0
        %770 = vmatprep.subr.mxu0 0.0
        %771 = vmatpush2.msra.mxu0 0.0
        %772 = vmatprep.subr.mxu0 0.0
        %773 = vmatpush2.msra.mxu0 0.0
        %774 = vmatprep.subr.mxu0 0.0
        %775 = vmatpush2.msra.mxu0 0.0
        %776 = vmatprep.subr.mxu0 0.0
        %777 = vmatpush2.msra.mxu0 0.0
        %778 = vmatprep.subr.mxu0 0.0
        %779 = vmatpush2.msra.mxu0 0.0
        %780 = vmatprep.mubr.f32.mxu0 0.0
        %781 = vmatmul.mubr.f32.gmra.mxu0 %v692
        %v782 = vpop.f32.mrf.mxu0
        %v783 = vadd.f32 %v714, %v782
        %v784 = vpop.f32.mrf.mxu0
        %785 = vdwg.mxu0
        %786 = vst [vmem:[%s310] sm:$0xff] %v783
        %s787 = sand.u32 %s164, 1
        %s788 = scalar_lea.sflag [#allocation4], %s787
        %s789 = sand.u32 %s164, 1
        %s790 = smul.addr %s789, 8
        %s791 = scalar_lea.vmem [#allocation10], %s790
        // Predicated region
        $region61: #{ae2_forward.1} parent=43 // pred_check
          %p792 = pneg %p174
        $region62: #{ae2_forward.1} parent=43 // pred_check_branch
          %794 = sbr.rel (%p792) target = $region64
        $region63: #{ae2_forward.1} parent=43 // pred_region
          %s796 = ssub.s32 128, 128
          %797 = vsyncadd %s788, %s796
          %s798 = smul.addr %s25, 128
          %s799 = scalar_lea.hbm %s6, %s798
          %s801 = sshll.u32 %s791, 4
          %s802 = int_to_ptr.vmem [resolvable:$true] %s801
          %804 = dma.vmem_to_hbm [thread:$0]  %s802, 128, %s799, %s788
        $region64: #{ae2_forward.1} parent=43 // pred_fallthru
          _
      $region44: #{ae2_forward.1} parent=5 // pred_fallthru
        _
      %p805 = scmp.le.s32.totalorder 2, %s20
      // Predicated region
      $region65: #{ae2_forward.1} parent=5 // pred_check
        %p806 = pneg %p805
      $region66: #{ae2_forward.1} parent=5 // pred_check_branch
        %808 = sbr.rel (%p806) target = $region68
      $region67: #{ae2_forward.1} parent=5 // pred_region
        %s809 = ssub.s32 %s20, 2
        // Predicated region
        $region69: #{ae2_forward.1} parent=67 // pred_check
          %p810 = pneg %p180
        $region70: #{ae2_forward.1} parent=67 // pred_check_branch
          %812 = sbr.rel (%p810) target = $region72
        $region71: #{ae2_forward.1} parent=67 // pred_region
          %s813 = sand.u32 %s165, 1
          %s814 = scalar_lea.sflag [#allocation4], %s813
          %s815 = sand.u32 %s165, 1
          %s816 = smul.addr %s815, 8
          %s817 = scalar_lea.vmem [#allocation10], %s816
          %818 = dma.done %s814, 128
        $region72: #{ae2_forward.1} parent=67 // pred_fallthru
          _
      $region68: #{ae2_forward.1} parent=5 // pred_fallthru
        _
    $region6: #{ae2_forward.1} parent=1 // loop_footer
      %s24 = sadd.s32 1, %s20
    $region7: #{ae2_forward.1} parent=1 // loop_footer_branch
      %19 = sbr.rel target = $region3
    $region8: #{ae2_forward.1} parent=1 // loop_exit
      _
    %819 = vsyncpa [#allocation3], 1
    %s820 = scalar_lea.sflag [#allocation3], 1
    %821 = vsyncpa %s820, 1
    %822 = vsyncpa [#allocation6], 1
    %823 = vsyncpa [#allocation9], 1
    %824 = vsyncpa [#allocation4], 1
    %s825 = scalar_lea.sflag [#allocation4], 1
    %826 = vsyncpa %s825, 1

</llo_original>
